<compile_context>
chip_gen: v6e
topology: v6e:2x2x1
jax: 0.10.0
libtpu: 0.0.40
codegen_flags: <defaults>
</compile_context>

<pallas_src>
import jax
import jax.numpy as jnp
from jax import lax
from jax.experimental import pallas as pl
from jax.experimental.pallas import tpu as pltpu


def biaffine_kernel(xs_ref, w_ref, b_ref, root_ref, out_ref):
    """One tile of TB sentences per grid step.

    xs_ref   : (TB, N, D)      word embeddings
    w_ref    : (D, 2D)         fused [W_dep^T | W_hed^T]
    b_ref    : (1, 2D)         fused [b_dep | b_hed]
    root_ref : (1, D)          learned ROOT embedding
    out_ref  : (TB, N, N_pad)  padded pairwise scores (column 0 = ROOT)
    """
    tb, n, d = xs_ref.shape
    n_pad = out_ref.shape[2]

    # Fused projection: (TB*N, 2D) = (TB*N, D) @ (D, 2D) + bias.
    x2 = xs_ref[...].reshape(tb * n, d)
    y = jnp.dot(x2, w_ref[...], preferred_element_type=jnp.float32) + b_ref[...]

    deps = y[:, :d].reshape(tb, n, d)       # depr(xs)
    heds = y[:, d:].reshape(tb, n, d)       # hedr(xs)

    # Extended heads: row 0 = ROOT, rows 1..N = hedr(xs), rows N+1.. = 0.
    root_b = jnp.broadcast_to(
        root_ref[...].reshape(1, 1, d).astype(jnp.float32), (tb, 1, d))
    parts = [root_b, heds]
    tail = n_pad - n - 1
    if tail > 0:
        parts.append(jnp.zeros((tb, tail, d), dtype=jnp.float32))
    heds_ext = jnp.concatenate(parts, axis=1)            # (TB, N_pad, D)

    # Pairwise scores: contract D on the last dim of BOTH operands
    # (no materialized transpose); output is already the full lane-dense
    # padded tile -> one unmasked full-tile store.
    out_ref[...] = lax.dot_general(
        deps, heds_ext,
        dimension_numbers=(((2,), (2,)), ((0,), (0,))),
        preferred_element_type=jnp.float32).astype(out_ref.dtype)


def _round_up(x, m):
    return pl.cdiv(x, m) * m


def biaffine_forward(xs, w_dep, b_dep, w_hed, b_hed, root, *, batch_tile=None):
    """xs: [B, N, D]; w_*: [D, D] PyTorch Linear weights (y = x W^T + b).

    Returns [B, N, N+1] scores (column 0 is the ROOT score), matching
    Biaffine.forward of the PyTorch module.
    """
    B, N, D = xs.shape
    n_pad = _round_up(N + 1, 128)          # lane-dense output slab

    # Fused projection weight / bias, prepared once in the wrapper.
    w_fused = jnp.concatenate([w_dep.T, w_hed.T], axis=1)          # (D, 2D)
    b_fused = jnp.concatenate([b_dep, b_hed]).reshape(1, 2 * D)    # (1, 2D)
    root2d = root.reshape(1, D)

    # Batch tile: target >= 256 matmul rows per step (MXU height on v6e/v7x),
    # capped by B.  For very large D, re-derive TB against the VMEM budget
    # (v7x: 64 MiB physical).
    if batch_tile is None:
        batch_tile = max(1, min(B, pl.cdiv(256, N)))
    tb = batch_tile

    b_pad = _round_up(B, tb)
    if b_pad != B:
        xs = jnp.pad(xs, ((0, b_pad - B), (0, 0), (0, 0)))

    grid = (b_pad // tb,)

    out = pl.pallas_call(
        biaffine_kernel,
        out_shape=jax.ShapeDtypeStruct((b_pad, N, n_pad), xs.dtype),
        grid_spec=pltpu.PrefetchScalarGridSpec(
            num_scalar_prefetch=0,
            grid=grid,
            in_specs=[
                pl.BlockSpec((tb, N, D), lambda b: (b, 0, 0)),     # xs tile
                pl.BlockSpec((D, 2 * D), lambda b: (0, 0)),        # fused W
                pl.BlockSpec((1, 2 * D), lambda b: (0, 0)),        # fused bias
                pl.BlockSpec((1, D), lambda b: (0, 0)),            # root
            ],
            out_specs=pl.BlockSpec((tb, N, n_pad), lambda b: (b, 0, 0)),
        ),
        compiler_params=pltpu.CompilerParams(
            dimension_semantics=("parallel",)),
    )(xs, w_fused, b_fused, root2d)

    # Drop batch padding and lane padding (keep column 0 = ROOT).
    return out[:B, :, :N + 1]


def biaffine_reference(xs, w_dep, b_dep, w_hed, b_hed, root):
    """Plain-JAX mirror of the PyTorch forward() for verification."""
    B, N, D = xs.shape
    deps = xs @ w_dep.T + b_dep
    heds_x = xs @ w_hed.T + b_hed
    root_b = jnp.broadcast_to(root.reshape(1, 1, D), (B, 1, D))
    heds = jnp.concatenate([root_b, heds_x], axis=1)          # (B, N+1, D)
    return jnp.einsum('bnd,bmd->bnm', deps, heds)             # (B, N, N+1)


if __name__ == "__main__":
    B, N, D = 2, 8, 32          # batch, max sentence length, embedding size

    key = jax.random.PRNGKey(0)
    k_x, k_wd, k_bd, k_wh, k_bh, k_r = jax.random.split(key, 6)

    # Deterministic parameter init (mimics nn.Linear uniform init + randn root).
    bound = 1.0 / jnp.sqrt(D)
    xs = jax.random.normal(k_x, (B, N, D), dtype=jnp.float32)
    w_dep = jax.random.uniform(k_wd, (D, D), minval=-bound, maxval=bound,
                               dtype=jnp.float32)
    b_dep = jax.random.uniform(k_bd, (D,), minval=-bound, maxval=bound,
                               dtype=jnp.float32)
    w_hed = jax.random.uniform(k_wh, (D, D), minval=-bound, maxval=bound,
                               dtype=jnp.float32)
    b_hed = jax.random.uniform(k_bh, (D,), minval=-bound, maxval=bound,
                               dtype=jnp.float32)
    root = jax.random.normal(k_r, (D,), dtype=jnp.float32)

    out = biaffine_forward(xs, w_dep, b_dep, w_hed, b_hed, root)
    out = jax.block_until_ready(out)

    ref = biaffine_reference(xs, w_dep, b_dep, w_hed, b_hed, root)
    assert out.shape == (B, N, N + 1)
    assert jnp.allclose(out, ref, atol=1e-5, rtol=1e-5)

    print("KERNEL_OK")
</pallas_src>

<mosaic_0001>
module attributes {stable_mosaic.version = 11 : i64} {
  func.func @biaffine_kernel(%arg0: i32, %arg1: memref<2x8x32xf32, #tpu.memory_space<vmem>>, %arg2: memref<32x64xf32, #tpu.memory_space<vmem>>, %arg3: memref<1x64xf32, #tpu.memory_space<vmem>>, %arg4: memref<1x32xf32, #tpu.memory_space<vmem>>, %arg5: memref<2x8x128xf32, #tpu.memory_space<vmem>>) attributes {dimension_semantics = [#tpu.dimension_semantics<parallel>], iteration_bounds = array<i64: 1>, scalar_prefetch = 0 : i64, scratch_operands = 0 : i64, tpu.core_type = #tpu.core_type<tc>, window_params = [{transform_indices = @transform_0, window_bounds = array<i64: 2, 8, 32>}, {pipeline_mode = #tpu.pipeline_mode<synchronous>, transform_indices = @transform_1, window_bounds = array<i64: 32, 64>}, {pipeline_mode = #tpu.pipeline_mode<synchronous>, transform_indices = @transform_2, window_bounds = array<i64: 1, 64>}, {pipeline_mode = #tpu.pipeline_mode<synchronous>, transform_indices = @transform_3, window_bounds = array<i64: 1, 32>}, {transform_indices = @transform_4, window_bounds = array<i64: 2, 8, 128>}]} {
    %c0 = arith.constant 0 : index
    %c0_0 = arith.constant 0 : index
    %c0_1 = arith.constant 0 : index
    %0 = vector.load %arg1[%c0, %c0_0, %c0_1] : memref<2x8x32xf32, #tpu.memory_space<vmem>>, vector<2x8x32xf32>
    %1 = vector.shape_cast %0 : vector<2x8x32xf32> to vector<16x32xf32>
    %c0_2 = arith.constant 0 : index
    %c0_3 = arith.constant 0 : index
    %2 = vector.load %arg2[%c0_2, %c0_3] : memref<32x64xf32, #tpu.memory_space<vmem>>, vector<32x64xf32>
    %cst = arith.constant dense<0.000000e+00> : vector<16x64xf32>
    %3 = tpu.matmul %1, %2, %cst {dimension_numbers = #tpu.dot_dimension_numbers<[1], [0], [0], [1], [0, 0, 1, 1], [], []>} : vector<16x32xf32>, vector<32x64xf32>, vector<16x64xf32> -> vector<16x64xf32>
    %c0_4 = arith.constant 0 : index
    %c0_5 = arith.constant 0 : index
    %4 = vector.load %arg3[%c0_4, %c0_5] : memref<1x64xf32, #tpu.memory_space<vmem>>, vector<1x64xf32>
    %5 = vector.broadcast %4 : vector<1x64xf32> to vector<16x64xf32>
    %6 = arith.addf %3, %5 : vector<16x64xf32>
    %7 = vector.extract_strided_slice %6 {offsets = [0, 0], sizes = [16, 32], strides = [1, 1]} : vector<16x64xf32> to vector<16x32xf32>
    %8 = vector.shape_cast %7 : vector<16x32xf32> to vector<2x8x32xf32>
    %9 = vector.extract_strided_slice %6 {offsets = [0, 32], sizes = [16, 32], strides = [1, 1]} : vector<16x64xf32> to vector<16x32xf32>
    %10 = vector.shape_cast %9 : vector<16x32xf32> to vector<2x8x32xf32>
    %c0_6 = arith.constant 0 : index
    %c0_7 = arith.constant 0 : index
    %11 = vector.load %arg4[%c0_6, %c0_7] : memref<1x32xf32, #tpu.memory_space<vmem>>, vector<1x32xf32>
    %12 = vector.shape_cast %11 : vector<1x32xf32> to vector<1x1x32xf32>
    %13 = vector.shape_cast %12 : vector<1x1x32xf32> to vector<1x1x32xf32>
    %14 = vector.broadcast %13 : vector<1x1x32xf32> to vector<2x1x32xf32>
    %cst_8 = arith.constant 0.000000e+00 : f32
    %15 = vector.broadcast %cst_8 : f32 to vector<2x119x32xf32>
    %16 = tpu.concatenate %14, %10, %15 in 1 : vector<2x1x32xf32>, vector<2x8x32xf32>, vector<2x119x32xf32> -> vector<2x128x32xf32>
    %cst_9 = arith.constant dense<0.000000e+00> : vector<2x8x128xf32>
    %17 = tpu.matmul %8, %16, %cst_9 {dimension_numbers = #tpu.dot_dimension_numbers<[2], [2], [1], [1], [0, 0, 0, 1, 1, 1], [0], [0]>} : vector<2x8x32xf32>, vector<2x128x32xf32>, vector<2x8x128xf32> -> vector<2x8x128xf32>
    %c0_10 = arith.constant 0 : index
    %c0_11 = arith.constant 0 : index
    %c0_12 = arith.constant 0 : index
    %18 = vector.load %arg5[%c0_10, %c0_11, %c0_12] : memref<2x8x128xf32, #tpu.memory_space<vmem>>, vector<2x8x128xf32>
    tpu.vector_store %arg5[%c0_10, %c0_11, %c0_12], %17 {strides = array<i32>} : memref<2x8x128xf32, #tpu.memory_space<vmem>>, vector<2x8x128xf32>,
    return
  }
  func.func @transform_0(%arg0: i32) -> (i32, i32, i32) {
    %c0_i32 = arith.constant 0 : i32
    %c0_i32_0 = arith.constant 0 : i32
    %c0_i32_1 = arith.constant 0 : i32
    return %arg0, %c0_i32, %c0_i32_0 : i32, i32, i32
  }
  func.func @transform_1(%arg0: i32) -> (i32, i32) {
    %c0_i32 = arith.constant 0 : i32
    %c0_i32_0 = arith.constant 0 : i32
    %c0_i32_1 = arith.constant 0 : i32
    return %c0_i32, %c0_i32_0 : i32, i32
  }
  func.func @transform_2(%arg0: i32) -> (i32, i32) {
    %c0_i32 = arith.constant 0 : i32
    %c0_i32_0 = arith.constant 0 : i32
    %c0_i32_1 = arith.constant 0 : i32
    return %c0_i32, %c0_i32_0 : i32, i32
  }
  func.func @transform_3(%arg0: i32) -> (i32, i32) {
    %c0_i32 = arith.constant 0 : i32
    %c0_i32_0 = arith.constant 0 : i32
    %c0_i32_1 = arith.constant 0 : i32
    return %c0_i32, %c0_i32_0 : i32, i32
  }
  func.func @transform_4(%arg0: i32) -> (i32, i32, i32) {
    %c0_i32 = arith.constant 0 : i32
    %c0_i32_0 = arith.constant 0 : i32
    %c0_i32_1 = arith.constant 0 : i32
    return %arg0, %c0_i32, %c0_i32_0 : i32, i32, i32
  }
}

</mosaic_0001>

<llo_original>
// kernel: tpu_custom_call.1
$region0: #{tpu_custom_call.1}
  #allocation0 [shape = 'u32[]', space=smem, size = 0x4, offset = 0x4, fixed_abs, tag = 'smem constant byte address 0x4 - core index']
  #allocation1 [shape = 'u32[144,128]{1,0:T(1,128)}', space=vmem, size = 0x12000, scoped, tag = 'internal scratch']
  %s0 = inlined_call_operand.hbm [shape: f32[2,8,32], index: 0, kind: input, shape index: {}]
  %s1 = inlined_call_operand.hbm [shape: f32[32,64], index: 1, kind: input, shape index: {}]
  %s2 = inlined_call_operand.vmem [shape: f32[1,64], index: 2, kind: input, shape index: {}]
  %s3 = inlined_call_operand.vmem [shape: f32[1,32], index: 3, kind: input, shape index: {}]
  %s4 = inlined_call_operand.hbm [shape: f32[2,8,128], index: 4, kind: output, shape index: {}]
  %s5 = sld [smem:[#allocation0]]
  $region34: #{tpu_custom_call.1} parent=0
    _
  %s7 = ssub.s32 1, %s5
  %s8 = scalar_select 0, %s7, %s5
  $region1: #{tpu_custom_call.1} parent=0
    #allocation2 [shape = 'u8[8192]{0}', space=vmem, size = 0x2000, scoped, tag = 'input window, operand 0, single buffered']
    #allocation3 [shape = 's32[1]{0}', space=sflag, size = 0x4, scoped, tag = 'scoped memory for tpu_custom_call.1']
    #allocation4 [shape = 's32[1]{0}', space=sflag, size = 0x4, scoped, tag = 'scoped memory for tpu_custom_call.1']
    #allocation5 [shape = 'u8[16384]{0}', space=vmem, size = 0x4000, scoped, tag = 'input window, operand 1, single buffered']
    #allocation6 [shape = 's32[1]{0}', space=sflag, size = 0x4, scoped, tag = 'scoped memory for tpu_custom_call.1']
    #allocation7 [shape = 'u8[8192]{0}', space=vmem, size = 0x2000, scoped, tag = 'output window, operand 0, single buffered']
    %9 = vsyncpa [#allocation3], 0
    %10 = vsyncpa [#allocation6], 0
    %11 = vsyncpa [#allocation4], 0
    // Predicated region
    $region2: #{tpu_custom_call.1} parent=1 // pred_check
      _
    $region3: #{tpu_custom_call.1} parent=1 // pred_check_branch
      %13 = sbr.rel (0) target = $region5
    $region4: #{tpu_custom_call.1} parent=1 // pred_region
      %s15 = ssub.s32 256, 256
      %16 = vsyncadd [#allocation3], %s15
      %s17 = sshll.u32 [#allocation2], 4
      %s18 = int_to_ptr.vmem [resolvable:$true] %s17
      %23 = dma.hbm_to_vmem [thread:$0]  %s0, 256, %s18, [#allocation3], 128, 128, 8
    $region5: #{tpu_custom_call.1} parent=1 // pred_fallthru
      _
    // Predicated region
    $region6: #{tpu_custom_call.1} parent=1 // pred_check
      _
    $region7: #{tpu_custom_call.1} parent=1 // pred_check_branch
      %25 = sbr.rel (0) target = $region9
    $region8: #{tpu_custom_call.1} parent=1 // pred_region
      %s27 = ssub.s32 512, 512
      %28 = vsyncadd [#allocation6], %s27
      %s29 = sshll.u32 [#allocation5], 4
      %s30 = int_to_ptr.vmem [resolvable:$true] %s29
      %35 = dma.hbm_to_vmem [thread:$0]  %s1, 512, %s30, [#allocation6], 128, 128, 8
    $region9: #{tpu_custom_call.1} parent=1 // pred_fallthru
      _
    // Predicated region
    $region10: #{tpu_custom_call.1} parent=1 // pred_check
      _
    $region11: #{tpu_custom_call.1} parent=1 // pred_check_branch
      %37 = sbr.rel (0) target = $region13
    $region12: #{tpu_custom_call.1} parent=1 // pred_region
      _
    $region13: #{tpu_custom_call.1} parent=1 // pred_fallthru
      _
    // Predicated region
    $region14: #{tpu_custom_call.1} parent=1 // pred_check
      _
    $region15: #{tpu_custom_call.1} parent=1 // pred_check_branch
      %39 = sbr.rel (0) target = $region17
    $region16: #{tpu_custom_call.1} parent=1 // pred_region
      _
    $region17: #{tpu_custom_call.1} parent=1 // pred_fallthru
      _
    // Predicated region
    $region18: #{tpu_custom_call.1} parent=1 // pred_check
      _
    $region19: #{tpu_custom_call.1} parent=1 // pred_check_branch
      %41 = sbr.rel (0) target = $region21
    $region20: #{tpu_custom_call.1} parent=1 // pred_region
      %42 = dma.done [#allocation3], 256
    $region21: #{tpu_custom_call.1} parent=1 // pred_fallthru
      _
    // Predicated region
    $region22: #{tpu_custom_call.1} parent=1 // pred_check
      _
    $region23: #{tpu_custom_call.1} parent=1 // pred_check_branch
      %44 = sbr.rel (0) target = $region25
    $region24: #{tpu_custom_call.1} parent=1 // pred_region
      %45 = dma.done [#allocation6], 512
    $region25: #{tpu_custom_call.1} parent=1 // pred_fallthru
      _
    %v46 = vld [vmem:[#allocation2] sm:$0xff]
    %v47 = vld [vmem:[#allocation2 + $0x8] sm:$0xff]
    %v48 = vld [vmem:[#allocation5] sm:$0xff]
    %v49 = vld [vmem:[#allocation5 + $0x8] sm:$0xff]
    %v50 = vld [vmem:[#allocation5 + $0x10] sm:$0xff]
    %v51 = vld [vmem:[#allocation5 + $0x18] sm:$0xff]
    %v52 = vld [vmem:[%s2] sm:$0x1]
    %v54 = vlaneseq
    %v55 = vshrl.u32 %v54, 7
    %v56 = vsub.s32 0, %v55
    %v57 = vrot.slane %v52, %v56
    %vm59 = vcmask 261120
    %v61 = vsel %vm59, %v46, 0
    %v64 = vsel %vm59, %v47, 0
    %66 = vmatprep.subr.mxu0 0.0
    %67 = vmatpush1.msra.mxu0 0.0
    %68 = vmatprep.subr.mxu0 0.0
    %69 = vmatpush1.msra.mxu0 0.0
    %70 = vmatprep.subr.mxu0 0.0
    %71 = vmatpush1.msra.mxu0 0.0
    %72 = vmatprep.subr.mxu0 0.0
    %73 = vmatpush1.msra.mxu0 0.0
    %74 = vmatprep.subr.mxu0 0.0
    %75 = vmatpush1.msra.mxu0 0.0
    %76 = vmatprep.subr.mxu0 0.0
    %77 = vmatpush1.msra.mxu0 0.0
    %78 = vmatprep.subr.mxu0 0.0
    %79 = vmatpush1.msra.mxu0 0.0
    %80 = vmatprep.subr.mxu0 0.0
    %81 = vmatpush1.msra.mxu0 0.0
    %82 = vmatprep.subr.mxu0 0.0
    %83 = vmatpush1.msra.mxu0 0.0
    %84 = vmatprep.subr.mxu0 0.0
    %85 = vmatpush1.msra.mxu0 0.0
    %86 = vmatprep.subr.mxu0 0.0
    %87 = vmatpush1.msra.mxu0 0.0
    %88 = vmatprep.subr.mxu0 0.0
    %89 = vmatpush1.msra.mxu0 0.0
    %90 = vmatprep.subr.mxu0 0.0
    %91 = vmatpush1.msra.mxu0 %v51
    %92 = vmatprep.subr.mxu0 0.0
    %93 = vmatpush1.msra.mxu0 %v50
    %94 = vmatprep.subr.mxu0 0.0
    %95 = vmatpush1.msra.mxu0 %v49
    %96 = vmatprep.subr.mxu0 0.0
    %97 = vmatpush1.msra.mxu0 %v48
    %98 = vmatprep.subr.mxu0 0.0
    %99 = vmatpush2.msra.mxu0 0.0
    %100 = vmatprep.subr.mxu0 0.0
    %101 = vmatpush2.msra.mxu0 0.0
    %102 = vmatprep.subr.mxu0 0.0
    %103 = vmatpush2.msra.mxu0 0.0
    %104 = vmatprep.subr.mxu0 0.0
    %105 = vmatpush2.msra.mxu0 0.0
    %106 = vmatprep.subr.mxu0 0.0
    %107 = vmatpush2.msra.mxu0 0.0
    %108 = vmatprep.subr.mxu0 0.0
    %109 = vmatpush2.msra.mxu0 0.0
    %110 = vmatprep.subr.mxu0 0.0
    %111 = vmatpush2.msra.mxu0 0.0
    %112 = vmatprep.subr.mxu0 0.0
    %113 = vmatpush2.msra.mxu0 0.0
    %114 = vmatprep.subr.mxu0 0.0
    %115 = vmatpush2.msra.mxu0 0.0
    %116 = vmatprep.subr.mxu0 0.0
    %117 = vmatpush2.msra.mxu0 0.0
    %118 = vmatprep.subr.mxu0 0.0
    %119 = vmatpush2.msra.mxu0 0.0
    %120 = vmatprep.subr.mxu0 0.0
    %121 = vmatpush2.msra.mxu0 0.0
    %122 = vmatprep.subr.mxu0 0.0
    %123 = vmatpush2.msra.mxu0 0.0
    %124 = vmatprep.subr.mxu0 0.0
    %125 = vmatpush2.msra.mxu0 0.0
    %126 = vmatprep.subr.mxu0 0.0
    %127 = vmatpush2.msra.mxu0 0.0
    %128 = vmatprep.subr.mxu0 0.0
    %129 = vmatpush2.msra.mxu0 0.0
    %130 = vmatprep.mubr.f32.mxu0 0.0
    %131 = vmatmul.mubr.f32.gmra.mxu0 %v61
    %v132 = vpop.f32.mrf.mxu0
    %v133 = vadd.f32 %v57, %v132
    %v134 = vpop.f32.mrf.mxu0
    %135 = vmatprep.mubr.f32.mxu0 0.0
    %136 = vmatmul.mubr.f32.gmra.mxu0 %v64
    %v137 = vpop.f32.mrf.mxu0
    %v138 = vadd.f32 %v57, %v137
    %v139 = vpop.f32.mrf.mxu0
    %140 = vdwg.mxu0
    %v141 = vld [vmem:[%s3] sm:$0x1]
    %v144 = vrot.slane %v133, 7
    %v145 = vrot.slane %v138, 7
    %146 = vrot.lane.b32.xlu0 %v144, 96
    %v147 = vpop.permute.xlu0 %146
    %148 = vrot.lane.b32.xlu0 %v145, 96
    %v149 = vpop.permute.xlu0 %148
    %vm152 = vcmask 1040384
    %v153 = vsel %vm152, %v141, %v147
    %v154 = vsel %vm152, %v141, %v149
    %v155 = vsel %vm152, %v147, 0.0
    %v156 = vsel %vm152, %v149, 0.0
    %v157 = vsel %vm59, %v133, 0
    %v160 = vsel %vm59, %v153, 0
    %v163 = vsel %vm59, %v155, 0
    %v166 = vsel %vm59, 0.0, 0
    %168 = vmatprep.subr.mxu0 0.0
    %169 = vmatpush1.xpose.msra.mxu0 %v166
    %170 = vmatprep.subr.mxu0 0.0
    %171 = vmatpush1.xpose.msra.mxu0 %v166
    %172 = vmatprep.subr.mxu0 0.0
    %173 = vmatpush1.xpose.msra.mxu0 %v166
    %174 = vmatprep.subr.mxu0 0.0
    %175 = vmatpush1.xpose.msra.mxu0 %v166
    %176 = vmatprep.subr.mxu0 0.0
    %177 = vmatpush1.xpose.msra.mxu0 %v166
    %178 = vmatprep.subr.mxu0 0.0
    %179 = vmatpush1.xpose.msra.mxu0 %v166
    %180 = vmatprep.subr.mxu0 0.0
    %181 = vmatpush1.xpose.msra.mxu0 %v166
    %182 = vmatprep.subr.mxu0 0.0
    %183 = vmatpush1.xpose.msra.mxu0 %v166
    %184 = vmatprep.subr.mxu0 0.0
    %185 = vmatpush1.xpose.msra.mxu0 %v166
    %186 = vmatprep.subr.mxu0 0.0
    %187 = vmatpush1.xpose.msra.mxu0 %v166
    %188 = vmatprep.subr.mxu0 0.0
    %189 = vmatpush1.xpose.msra.mxu0 %v166
    %190 = vmatprep.subr.mxu0 0.0
    %191 = vmatpush1.xpose.msra.mxu0 %v166
    %192 = vmatprep.subr.mxu0 0.0
    %193 = vmatpush1.xpose.msra.mxu0 %v166
    %194 = vmatprep.subr.mxu0 0.0
    %195 = vmatpush1.xpose.msra.mxu0 %v166
    %196 = vmatprep.subr.mxu0 0.0
    %197 = vmatpush1.xpose.msra.mxu0 %v163
    %198 = vmatprep.subr.mxu0 0.0
    %199 = vmatpush1.xpose.msra.mxu0 %v160
    %200 = vmatprep.subr.mxu0 0.0
    %201 = vmatpush2.xpose.msra.mxu0 0.0
    %202 = vmatprep.subr.mxu0 0.0
    %203 = vmatpush2.xpose.msra.mxu0 0.0
    %204 = vmatprep.subr.mxu0 0.0
    %205 = vmatpush2.xpose.msra.mxu0 0.0
    %206 = vmatprep.subr.mxu0 0.0
    %207 = vmatpush2.xpose.msra.mxu0 0.0
    %208 = vmatprep.subr.mxu0 0.0
    %209 = vmatpush2.xpose.msra.mxu0 0.0
    %210 = vmatprep.subr.mxu0 0.0
    %211 = vmatpush2.xpose.msra.mxu0 0.0
    %212 = vmatprep.subr.mxu0 0.0
    %213 = vmatpush2.xpose.msra.mxu0 0.0
    %214 = vmatprep.subr.mxu0 0.0
    %215 = vmatpush2.xpose.msra.mxu0 0.0
    %216 = vmatprep.subr.mxu0 0.0
    %217 = vmatpush2.xpose.msra.mxu0 0.0
    %218 = vmatprep.subr.mxu0 0.0
    %219 = vmatpush2.xpose.msra.mxu0 0.0
    %220 = vmatprep.subr.mxu0 0.0
    %221 = vmatpush2.xpose.msra.mxu0 0.0
    %222 = vmatprep.subr.mxu0 0.0
    %223 = vmatpush2.xpose.msra.mxu0 0.0
    %224 = vmatprep.subr.mxu0 0.0
    %225 = vmatpush2.xpose.msra.mxu0 0.0
    %226 = vmatprep.subr.mxu0 0.0
    %227 = vmatpush2.xpose.msra.mxu0 0.0
    %228 = vmatprep.subr.mxu0 0.0
    %229 = vmatpush2.xpose.msra.mxu0 0.0
    %230 = vmatprep.subr.mxu0 0.0
    %231 = vmatpush2.xpose.msra.mxu0 0.0
    %232 = vmatprep.mubr.f32.mxu0 0.0
    %233 = vmatmul.mubr.f32.gmra.mxu0 %v157
    %v234 = vpop.f32.mrf.mxu0
    %v235 = vadd.f32 0.0, %v234
    %v236 = vpop.f32.mrf.mxu0
    %237 = vdwg.mxu0
    %v238 = vsel %vm59, %v138, 0
    %v241 = vsel %vm59, %v154, 0
    %v244 = vsel %vm59, %v156, 0
    %246 = vmatprep.subr.mxu0 0.0
    %247 = vmatpush1.xpose.msra.mxu0 %v166
    %248 = vmatprep.subr.mxu0 0.0
    %249 = vmatpush1.xpose.msra.mxu0 %v166
    %250 = vmatprep.subr.mxu0 0.0
    %251 = vmatpush1.xpose.msra.mxu0 %v166
    %252 = vmatprep.subr.mxu0 0.0
    %253 = vmatpush1.xpose.msra.mxu0 %v166
    %254 = vmatprep.subr.mxu0 0.0
    %255 = vmatpush1.xpose.msra.mxu0 %v166
    %256 = vmatprep.subr.mxu0 0.0
    %257 = vmatpush1.xpose.msra.mxu0 %v166
    %258 = vmatprep.subr.mxu0 0.0
    %259 = vmatpush1.xpose.msra.mxu0 %v166
    %260 = vmatprep.subr.mxu0 0.0
    %261 = vmatpush1.xpose.msra.mxu0 %v166
    %262 = vmatprep.subr.mxu0 0.0
    %263 = vmatpush1.xpose.msra.mxu0 %v166
    %264 = vmatprep.subr.mxu0 0.0
    %265 = vmatpush1.xpose.msra.mxu0 %v166
    %266 = vmatprep.subr.mxu0 0.0
    %267 = vmatpush1.xpose.msra.mxu0 %v166
    %268 = vmatprep.subr.mxu0 0.0
    %269 = vmatpush1.xpose.msra.mxu0 %v166
    %270 = vmatprep.subr.mxu0 0.0
    %271 = vmatpush1.xpose.msra.mxu0 %v166
    %272 = vmatprep.subr.mxu0 0.0
    %273 = vmatpush1.xpose.msra.mxu0 %v166
    %274 = vmatprep.subr.mxu0 0.0
    %275 = vmatpush1.xpose.msra.mxu0 %v244
    %276 = vmatprep.subr.mxu0 0.0
    %277 = vmatpush1.xpose.msra.mxu0 %v241
    %278 = vmatprep.subr.mxu0 0.0
    %279 = vmatpush2.xpose.msra.mxu0 0.0
    %280 = vmatprep.subr.mxu0 0.0
    %281 = vmatpush2.xpose.msra.mxu0 0.0
    %282 = vmatprep.subr.mxu0 0.0
    %283 = vmatpush2.xpose.msra.mxu0 0.0
    %284 = vmatprep.subr.mxu0 0.0
    %285 = vmatpush2.xpose.msra.mxu0 0.0
    %286 = vmatprep.subr.mxu0 0.0
    %287 = vmatpush2.xpose.msra.mxu0 0.0
    %288 = vmatprep.subr.mxu0 0.0
    %289 = vmatpush2.xpose.msra.mxu0 0.0
    %290 = vmatprep.subr.mxu0 0.0
    %291 = vmatpush2.xpose.msra.mxu0 0.0
    %292 = vmatprep.subr.mxu0 0.0
    %293 = vmatpush2.xpose.msra.mxu0 0.0
    %294 = vmatprep.subr.mxu0 0.0
    %295 = vmatpush2.xpose.msra.mxu0 0.0
    %296 = vmatprep.subr.mxu0 0.0
    %297 = vmatpush2.xpose.msra.mxu0 0.0
    %298 = vmatprep.subr.mxu0 0.0
    %299 = vmatpush2.xpose.msra.mxu0 0.0
    %300 = vmatprep.subr.mxu0 0.0
    %301 = vmatpush2.xpose.msra.mxu0 0.0
    %302 = vmatprep.subr.mxu0 0.0
    %303 = vmatpush2.xpose.msra.mxu0 0.0
    %304 = vmatprep.subr.mxu0 0.0
    %305 = vmatpush2.xpose.msra.mxu0 0.0
    %306 = vmatprep.subr.mxu0 0.0
    %307 = vmatpush2.xpose.msra.mxu0 0.0
    %308 = vmatprep.subr.mxu0 0.0
    %309 = vmatpush2.xpose.msra.mxu0 0.0
    %310 = vmatprep.mubr.f32.mxu0 0.0
    %311 = vmatmul.mubr.f32.gmra.mxu0 %v238
    %v312 = vpop.f32.mrf.mxu0
    %v313 = vadd.f32 0.0, %v312
    %v314 = vpop.f32.mrf.mxu0
    %315 = vdwg.mxu0
    %316 = vst [vmem:[#allocation7] sm:$0xff] %v235
    %317 = vst [vmem:[#allocation7 + $0x8] sm:$0xff] %v313
    // Predicated region
    $region26: #{tpu_custom_call.1} parent=1 // pred_check
      _
    $region27: #{tpu_custom_call.1} parent=1 // pred_check_branch
      %319 = sbr.rel (0) target = $region29
    $region28: #{tpu_custom_call.1} parent=1 // pred_region
      %s321 = ssub.s32 256, 256
      %322 = vsyncadd [#allocation4], %s321
      %s323 = sshll.u32 [#allocation7], 4
      %s324 = int_to_ptr.vmem [resolvable:$true] %s323
      %329 = dma.vmem_to_hbm [thread:$0]  %s324, 256, %s4, [#allocation4], 128, 128, 8
    $region29: #{tpu_custom_call.1} parent=1 // pred_fallthru
      _
    // Predicated region
    $region30: #{tpu_custom_call.1} parent=1 // pred_check
      _
    $region31: #{tpu_custom_call.1} parent=1 // pred_check_branch
      %331 = sbr.rel (0) target = $region33
    $region32: #{tpu_custom_call.1} parent=1 // pred_region
      %332 = dma.done [#allocation4], 256
    $region33: #{tpu_custom_call.1} parent=1 // pred_fallthru
      _
    %333 = vsyncpa [#allocation3], 1
    %334 = vsyncpa [#allocation6], 1
    %335 = vsyncpa [#allocation4], 1

</llo_original>
